<compile_context>
chip_gen: v6e
topology: v6e:2x2x1
jax: 0.10.0
libtpu: 0.0.40
codegen_flags: <defaults>
</compile_context>

<pallas_src>
import functools

import jax
import jax.numpy as jnp
import numpy as np
from jax.experimental import pallas as pl
from jax.experimental.pallas import tpu as pltpu


def _round_up(x, m):
    return (x + m - 1) // m * m


def _attention_kernel(s_ref, enc_ref, w_enc_ref, w_dec_ref, v_ref, o_ref,
                      scores_ref, *, src_len):
    # s_ref:      (TB, dec_hid)          decoder state tile (f32)
    # enc_ref:    (TS, TB, 2E)           encoder tile, NATIVE layout
    # w_enc_ref:  (2E, Hp)               Hp = dec_hid padded to 128 lanes
    # w_dec_ref:  (dec_hid, Hp)
    # v_ref:      (1, Hp)
    # o_ref:      (TB, S_pad)            lane-dense softmax output (resident over src)
    # scores_ref: (S_pad, TB)            persistent VMEM scratch (scores, src-major)
    si = pl.program_id(1)
    ts, tb, _ = enc_ref.shape
    s_pad = o_ref.shape[1]

    # Decoder-state projection: tiny matmul, once per grid step (not per src pos).
    s_proj = jnp.dot(s_ref[...], w_dec_ref[...],
                     preferred_element_type=jnp.float32)                 # (TB, Hp)

    # One flattened MXU matmul: M = TS*TB actually fills the systolic array.
    enc_flat = enc_ref[...].reshape(ts * tb, enc_ref.shape[2])
    e = jnp.dot(enc_flat, w_enc_ref[...],
                preferred_element_type=jnp.float32)                      # (TS*TB, Hp)
    energy = jnp.tanh(e.reshape(ts, tb, -1) + s_proj[None, :, :])        # (TS, TB, Hp)

    # v-projection: VPU multiply + lane reduce (avoids an N=1 matmul).
    col = jnp.sum(energy * v_ref[...].astype(jnp.float32)[None, :, :],
                  axis=-1)                                               # (TS, TB)

    # Deposit this src tile's scores (dynamic sublane-offset store, no scatter).
    start = pl.multiple_of(si * ts, ts)
    scores_ref[pl.ds(start, ts), :] = col

    # Final src step: masked, numerically stable softmax over the lane axis.
    @pl.when(si == pl.num_programs(1) - 1)
    def _():
        sc = jnp.transpose(scores_ref[...])                              # (TB, S_pad)
        if s_pad != src_len:   # static branch: mask padded / ragged src columns
            lane = jax.lax.broadcasted_iota(jnp.int32, (tb, s_pad), 1)
            sc = jnp.where(lane < src_len, sc, -jnp.inf)
        m = jnp.max(sc, axis=-1, keepdims=True)
        ex = jnp.exp(sc - m)
        denom = jnp.sum(ex, axis=-1, keepdims=True)
        r = pl.reciprocal(denom, approx=True)        # EUP estimate (free slot)
        r = r * (2.0 - denom * r)                    # one Newton step -> f32 accurate
        o_ref[...] = (ex * r).astype(o_ref.dtype)


def attention_forward(s, enc_output, w_attn, w_v, *, batch_tile=None, src_tile=None):
    """s: (batch, dec_hid); enc_output: (src_len, batch, enc_hid*2) in its native layout
    w_attn: PyTorch nn.Linear weight (dec_hid, enc_hid*2 + dec_hid), bias-free,
            acting on cat([s, enc], dim=-1)  -> split into W_dec | W_enc here.
    w_v:    PyTorch layout (1, dec_hid).
    enc_output may already be bf16 (recommended on all of v5e/v6e/v7x); the
    wrapper never copies/casts it.  Returns (batch, src_len) float32 softmax."""
    src_len, batch, enc2 = enc_output.shape
    dec_hid = s.shape[1]
    hp = _round_up(dec_hid, 128)                     # pad MXU N dim to 128 lanes
    enc_dtype = enc_output.dtype
    esize = jnp.dtype(enc_dtype).itemsize

    # Split the concatenated-feature weight (torch.cat([s, enc]) order), move to
    # (in, out) layout and zero-pad the output (H) axis to 128 lanes.
    w_dec = jnp.pad(jnp.transpose(w_attn[:, :dec_hid]).astype(jnp.float32),
                    ((0, 0), (0, hp - dec_hid)))                     # (dec_hid, Hp)
    w_enc = jnp.pad(jnp.transpose(w_attn[:, dec_hid:]),
                    ((0, 0), (0, hp - dec_hid))).astype(enc_dtype)   # (2E, Hp)
    v_row = jnp.pad(w_v.astype(jnp.float32), ((0, 0), (0, hp - dec_hid)))  # (1, Hp)

    s_in = s.astype(jnp.float32)
    enc_in = enc_output

    # Tiny-batch zero-pad (only when batch < 8, so the copy is negligible) so the
    # batch tile is a multiple of 8 -> tile-aligned in-kernel reshapes.
    if batch < 8:
        batch_p = 8
        s_in = jnp.pad(s_in, ((0, batch_p - batch), (0, 0)))
        enc_in = jnp.pad(enc_in, ((0, 0), (0, batch_p - batch), (0, 0)))
    else:
        batch_p = batch

    # Batch tile: multiple of 8, up to 128; keep >= 2 parallel grid tiles when
    # batch >= 16 so both v7x TensorCores have work (costs nothing on 1-TC parts).
    if batch_tile is not None:
        tb = batch_tile
    elif batch_p <= 8:
        tb = batch_p
    else:
        tb = min(128, (batch_p // 8) * 8)
        if batch_p >= 16:
            tb = min(tb, max(8, ((batch_p // 2) // 8) * 8))

    # src tile: bound the enc double-buffer DMA footprint and matmul temporaries.
    if src_tile is not None:
        ts = max(1, min(src_tile, src_len))
    else:
        dma_cap = max(8, (24 << 20) // (2 * tb * enc2 * esize))
        cmp_cap = max(8, 2048 // tb)
        ts = min(src_len, 512, dma_cap, cmp_cap)

    ns = pl.cdiv(src_len, ts)
    s_pad = _round_up(max(src_len, ns * ts), 128)    # lane-dense output width

    # Explicit VMEM budget (v7x has only 64 MiB physical; 48 MiB is safe everywhere).
    est = (2 * ts * tb * enc2 * esize                        # enc double buffer
           + 2 * tb * dec_hid * 4                            # s
           + 2 * (enc2 * hp * esize + dec_hid * hp * 4 + hp * 4)   # weights
           + 2 * tb * s_pad * 4                              # resident output block
           + s_pad * tb * 4                                  # scores scratch
           + 3 * ts * tb * hp * 4)                           # matmul/tanh temporaries
    vmem_limit = int(min(max(est + (8 << 20), 32 << 20), 48 << 20))

    grid = (pl.cdiv(batch_p, tb), ns)

    out = pl.pallas_call(
        functools.partial(_attention_kernel, src_len=src_len),
        out_shape=jax.ShapeDtypeStruct((batch_p, s_pad), jnp.float32),
        grid_spec=pltpu.PrefetchScalarGridSpec(
            num_scalar_prefetch=0,
            grid=grid,
            in_specs=[
                pl.BlockSpec((tb, dec_hid), lambda b, si: (b, 0)),        # s
                pl.BlockSpec((ts, tb, enc2), lambda b, si: (si, b, 0)),   # enc (native)
                pl.BlockSpec((enc2, hp), lambda b, si: (0, 0)),           # W_enc (resident)
                pl.BlockSpec((dec_hid, hp), lambda b, si: (0, 0)),        # W_dec (resident)
                pl.BlockSpec((1, hp), lambda b, si: (0, 0)),              # v (resident)
            ],
            out_specs=pl.BlockSpec((tb, s_pad), lambda b, si: (b, 0)),    # resident over src
            scratch_shapes=[pltpu.VMEM((s_pad, tb), jnp.float32)],
        ),
        compiler_params=pltpu.CompilerParams(
            dimension_semantics=("parallel", "arbitrary"),
            vmem_limit_bytes=vmem_limit,
        ),
    )(s_in, enc_in, w_enc, w_dec, v_row)

    return out[:batch, :src_len]


def _reference(s, enc_output, w_attn, w_v):
    src_len, batch, _ = enc_output.shape
    s_rep = jnp.broadcast_to(s[:, None, :], (batch, src_len, s.shape[1]))
    enc_t = jnp.transpose(enc_output, (1, 0, 2))
    cat = jnp.concatenate([s_rep, enc_t], axis=2)
    energy = jnp.tanh(jnp.einsum("bsd,hd->bsh", cat, w_attn,
                                 precision=jax.lax.Precision.HIGHEST))
    attention = jnp.einsum("bsh,oh->bso", energy, w_v,
                           precision=jax.lax.Precision.HIGHEST)[:, :, 0]
    return jax.nn.softmax(attention, axis=1)


if __name__ == "__main__":
    # Small, forward-consistent shapes
    enc_hid_dim = 32
    dec_hid_dim = 32
    batch = 2
    src_len = 8

    key = jax.random.PRNGKey(0)
    k1, k2, k3, k4 = jax.random.split(key, 4)

    # deterministic synthetic parameters (PyTorch nn.Linear weight layouts)
    w_attn = (jax.random.normal(k1, (dec_hid_dim, enc_hid_dim * 2 + dec_hid_dim),
                                jnp.float32) * 0.1)                   # attn.weight
    w_v = jax.random.normal(k2, (1, dec_hid_dim), jnp.float32) * 0.1  # v.weight

    # deterministic inputs
    s = jax.random.normal(k3, (batch, dec_hid_dim), jnp.float32)
    enc_output = jax.random.normal(
        k4, (src_len, batch, enc_hid_dim * 2), jnp.float32)

    out = jax.block_until_ready(attention_forward(s, enc_output, w_attn, w_v))
    ref = _reference(s, enc_output, w_attn, w_v)
    assert out.shape == (batch, src_len)
    np.testing.assert_allclose(np.asarray(out), np.asarray(ref), atol=5e-5, rtol=5e-5)
    np.testing.assert_allclose(np.asarray(out).sum(axis=1), np.ones(batch), atol=1e-4)

    # Multi-tile path: 2 batch tiles x 3 src tiles (last one ragged) — still small.
    b2, sl2 = 16, 40
    k5, k6 = jax.random.split(k4)
    s2 = jax.random.normal(k5, (b2, dec_hid_dim), jnp.float32)
    enc_out2 = jax.random.normal(k6, (sl2, b2, enc_hid_dim * 2), jnp.float32)
    out2 = jax.block_until_ready(
        attention_forward(s2, enc_out2, w_attn, w_v, batch_tile=8, src_tile=16))
    ref2 = _reference(s2, enc_out2, w_attn, w_v)
    np.testing.assert_allclose(np.asarray(out2), np.asarray(ref2), atol=5e-5, rtol=5e-5)

    # bf16 encoder activations: no wrapper-side cast copy; weights follow enc dtype.
    out_bf16 = jax.block_until_ready(
        attention_forward(s, enc_output.astype(jnp.bfloat16), w_attn, w_v))
    np.testing.assert_allclose(np.asarray(out_bf16), np.asarray(ref),
                               atol=5e-2, rtol=5e-2)

    print("KERNEL_OK")
</pallas_src>

<mosaic_0001>
module attributes {stable_mosaic.version = 11 : i64} {
  func.func @_attention_kernel(%arg0: i32, %arg1: i32, %arg2: memref<8x32xf32, #tpu.memory_space<vmem>>, %arg3: memref<8x8x64xf32, #tpu.memory_space<vmem>>, %arg4: memref<64x128xf32, #tpu.memory_space<vmem>>, %arg5: memref<32x128xf32, #tpu.memory_space<vmem>>, %arg6: memref<1x128xf32, #tpu.memory_space<vmem>>, %arg7: memref<8x128xf32, #tpu.memory_space<vmem>>, %arg8: memref<128x8xf32, #tpu.memory_space<vmem>>) attributes {dimension_semantics = [#tpu.dimension_semantics<parallel>, #tpu.dimension_semantics<arbitrary>], iteration_bounds = array<i64: 1, 1>, scalar_prefetch = 0 : i64, scratch_operands = 1 : i64, tpu.core_type = #tpu.core_type<tc>, window_params = [{transform_indices = @transform_0, window_bounds = array<i64: 8, 32>}, {transform_indices = @transform_1, window_bounds = array<i64: 8, 8, 64>}, {pipeline_mode = #tpu.pipeline_mode<synchronous>, transform_indices = @transform_2, window_bounds = array<i64: 64, 128>}, {pipeline_mode = #tpu.pipeline_mode<synchronous>, transform_indices = @transform_3, window_bounds = array<i64: 32, 128>}, {pipeline_mode = #tpu.pipeline_mode<synchronous>, transform_indices = @transform_4, window_bounds = array<i64: 1, 128>}, {transform_indices = @transform_5, window_bounds = array<i64: 8, 128>}]} {
    %c0 = arith.constant 0 : index
    %c0_0 = arith.constant 0 : index
    %0 = vector.load %arg2[%c0, %c0_0] : memref<8x32xf32, #tpu.memory_space<vmem>>, vector<8x32xf32>
    %c0_1 = arith.constant 0 : index
    %c0_2 = arith.constant 0 : index
    %1 = vector.load %arg5[%c0_1, %c0_2] : memref<32x128xf32, #tpu.memory_space<vmem>>, vector<32x128xf32>
    %cst = arith.constant dense<0.000000e+00> : vector<8x128xf32>
    %2 = tpu.matmul %0, %1, %cst {dimension_numbers = #tpu.dot_dimension_numbers<[1], [0], [0], [1], [0, 0, 1, 1], [], []>} : vector<8x32xf32>, vector<32x128xf32>, vector<8x128xf32> -> vector<8x128xf32>
    %c0_3 = arith.constant 0 : index
    %c0_4 = arith.constant 0 : index
    %c0_5 = arith.constant 0 : index
    %3 = vector.load %arg3[%c0_3, %c0_4, %c0_5] : memref<8x8x64xf32, #tpu.memory_space<vmem>>, vector<8x8x64xf32>
    %4 = vector.shape_cast %3 : vector<8x8x64xf32> to vector<64x64xf32>
    %c0_6 = arith.constant 0 : index
    %c0_7 = arith.constant 0 : index
    %5 = vector.load %arg4[%c0_6, %c0_7] : memref<64x128xf32, #tpu.memory_space<vmem>>, vector<64x128xf32>
    %cst_8 = arith.constant dense<0.000000e+00> : vector<64x128xf32>
    %6 = tpu.matmul %4, %5, %cst_8 {dimension_numbers = #tpu.dot_dimension_numbers<[1], [0], [0], [1], [0, 0, 1, 1], [], []>} : vector<64x64xf32>, vector<64x128xf32>, vector<64x128xf32> -> vector<64x128xf32>
    %7 = vector.shape_cast %6 : vector<64x128xf32> to vector<8x8x128xf32>
    %8 = vector.shape_cast %2 : vector<8x128xf32> to vector<1x8x128xf32>
    %9 = vector.broadcast %8 : vector<1x8x128xf32> to vector<8x8x128xf32>
    %10 = arith.addf %7, %9 : vector<8x8x128xf32>
    %11 = math.tanh %10 : vector<8x8x128xf32>
    %c0_9 = arith.constant 0 : index
    %c0_10 = arith.constant 0 : index
    %12 = vector.load %arg6[%c0_9, %c0_10] : memref<1x128xf32, #tpu.memory_space<vmem>>, vector<1x128xf32>
    %13 = vector.shape_cast %12 : vector<1x128xf32> to vector<1x1x128xf32>
    %14 = vector.broadcast %13 : vector<1x1x128xf32> to vector<8x8x128xf32>
    %15 = arith.mulf %11, %14 : vector<8x8x128xf32>
    %cst_11 = arith.constant dense<0.000000e+00> : vector<8x8xf32>
    %16 = vector.multi_reduction <add>, %15, %cst_11 [2] : vector<8x8x128xf32> to vector<8x8xf32>
    %c8_i32 = arith.constant 8 : i32
    %17 = arith.muli %arg1, %c8_i32 : i32
    %18 = tpu.assume_multiple %17, 8 : i32
    %19 = arith.index_cast %18 : i32 to index
    %c0_12 = arith.constant 0 : index
    %20 = vector.load %arg8[%19, %c0_12] : memref<128x8xf32, #tpu.memory_space<vmem>>, vector<8x8xf32>
    tpu.vector_store %arg8[%19, %c0_12], %16 {strides = array<i32>} : memref<128x8xf32, #tpu.memory_space<vmem>>, vector<8x8xf32>,
    %c0_i32 = arith.constant 0 : i32
    %21 = arith.cmpi eq, %arg1, %c0_i32 : i32
    %22 = arith.extui %21 : i1 to i32
    %c0_i32_13 = arith.constant 0 : i32
    %23 = arith.cmpi ne, %22, %c0_i32_13 : i32
    scf.if %23 {
      %c0_14 = arith.constant 0 : index
      %c0_15 = arith.constant 0 : index
      %24 = vector.load %arg8[%c0_14, %c0_15] : memref<128x8xf32, #tpu.memory_space<vmem>>, vector<128x8xf32>
      %25 = tpu.transpose %24, [1, 0] : vector<128x8xf32> -> vector<8x128xf32>
      %26 = tpu.iota {dimensions = array<i32: 1>} : vector<8x128xi32>
      %c8_i32_16 = arith.constant 8 : i32
      %27 = vector.broadcast %c8_i32_16 : i32 to vector<8x128xi32>
      %28 = arith.cmpi slt, %26, %27 : vector<8x128xi32>
      %cst_17 = arith.constant 0xFF800000 : f32
      %29 = vector.broadcast %cst_17 : f32 to vector<8x128xf32>
      %30 = arith.select %28, %25, %29 : vector<8x128xi1>, vector<8x128xf32>
      %cst_18 = arith.constant dense<0xFF800000> : vector<8xf32>
      %31 = vector.multi_reduction <maximumf>, %30, %cst_18 [1] : vector<8x128xf32> to vector<8xf32>
      %32 = vector.shape_cast %31 : vector<8xf32> to vector<8x1xf32>
      %33 = vector.broadcast %32 : vector<8x1xf32> to vector<8x128xf32>
      %34 = arith.subf %30, %33 : vector<8x128xf32>
      %35 = math.exp %34 : vector<8x128xf32>
      %cst_19 = arith.constant dense<0.000000e+00> : vector<8xf32>
      %36 = vector.multi_reduction <add>, %35, %cst_19 [1] : vector<8x128xf32> to vector<8xf32>
      %37 = vector.shape_cast %36 : vector<8xf32> to vector<8x1xf32>
      %38 = tpu.reciprocal %37 {approx = true} : vector<8x1xf32> -> vector<8x1xf32>
      %39 = arith.mulf %37, %38 : vector<8x1xf32>
      %cst_20 = arith.constant 2.000000e+00 : f32
      %40 = vector.broadcast %cst_20 : f32 to vector<8x1xf32>
      %41 = arith.subf %40, %39 : vector<8x1xf32>
      %42 = arith.mulf %38, %41 : vector<8x1xf32>
      %43 = vector.broadcast %42 : vector<8x1xf32> to vector<8x128xf32>
      %44 = arith.mulf %35, %43 : vector<8x128xf32>
      %c0_21 = arith.constant 0 : index
      %c0_22 = arith.constant 0 : index
      %45 = vector.load %arg7[%c0_21, %c0_22] : memref<8x128xf32, #tpu.memory_space<vmem>>, vector<8x128xf32>
      tpu.vector_store %arg7[%c0_21, %c0_22], %44 {strides = array<i32>} : memref<8x128xf32, #tpu.memory_space<vmem>>, vector<8x128xf32>,
    } else {
    }
    return
  }
  func.func @transform_0(%arg0: i32, %arg1: i32) -> (i32, i32) {
    %c0_i32 = arith.constant 0 : i32
    %c0_i32_0 = arith.constant 0 : i32
    return %arg0, %c0_i32 : i32, i32
  }
  func.func @transform_1(%arg0: i32, %arg1: i32) -> (i32, i32, i32) {
    %c0_i32 = arith.constant 0 : i32
    %c0_i32_0 = arith.constant 0 : i32
    return %arg1, %arg0, %c0_i32 : i32, i32, i32
  }
  func.func @transform_2(%arg0: i32, %arg1: i32) -> (i32, i32) {
    %c0_i32 = arith.constant 0 : i32
    %c0_i32_0 = arith.constant 0 : i32
    %c0_i32_1 = arith.constant 0 : i32
    return %c0_i32, %c0_i32_0 : i32, i32
  }
  func.func @transform_3(%arg0: i32, %arg1: i32) -> (i32, i32) {
    %c0_i32 = arith.constant 0 : i32
    %c0_i32_0 = arith.constant 0 : i32
    %c0_i32_1 = arith.constant 0 : i32
    return %c0_i32, %c0_i32_0 : i32, i32
  }
  func.func @transform_4(%arg0: i32, %arg1: i32) -> (i32, i32) {
    %c0_i32 = arith.constant 0 : i32
    %c0_i32_0 = arith.constant 0 : i32
    %c0_i32_1 = arith.constant 0 : i32
    return %c0_i32, %c0_i32_0 : i32, i32
  }
  func.func @transform_5(%arg0: i32, %arg1: i32) -> (i32, i32) {
    %c0_i32 = arith.constant 0 : i32
    %c0_i32_0 = arith.constant 0 : i32
    return %arg0, %c0_i32 : i32, i32
  }
}

</mosaic_0001>

<llo_original>
// kernel: tpu_custom_call.1
$region0: #{tpu_custom_call.1}
  #allocation0 [shape = 'u32[]', space=smem, size = 0x4, offset = 0x4, fixed_abs, tag = 'smem constant byte address 0x4 - core index']
  #allocation1 [shape = 'u32[144,128]{1,0:T(1,128)}', space=vmem, size = 0x12000, scoped, tag = 'internal scratch']
  #allocation2 [shape = 'f32[128,8]{1,0:T(8,128)}', space=vmem, size = 0x10000, scoped, tag = 'scratch operand']
  %s0 = inlined_call_operand.hbm [shape: f32[8,32], index: 0, kind: input, shape index: {}]
  %s1 = inlined_call_operand.hbm [shape: f32[8,8,64], index: 1, kind: input, shape index: {}]
  %s2 = inlined_call_operand.hbm [shape: f32[64,128], index: 2, kind: input, shape index: {}]
  %s3 = inlined_call_operand.hbm [shape: f32[32,128], index: 3, kind: input, shape index: {}]
  %s4 = inlined_call_operand.vmem [shape: f32[1,128], index: 4, kind: input, shape index: {}]
  %s5 = inlined_call_operand.hbm [shape: f32[8,128], index: 5, kind: output, shape index: {}]
  %s6 = sld [smem:[#allocation0]]
  $region50: #{tpu_custom_call.1} parent=0
    _
  %s8 = ssub.s32 1, %s6
  %s9 = scalar_select 0, %s8, %s6
  $region1: #{tpu_custom_call.1} parent=0
    #allocation3 [shape = 'u8[4096]{0}', space=vmem, size = 0x1000, scoped, tag = 'input window, operand 0, single buffered']
    #allocation4 [shape = 's32[1]{0}', space=sflag, size = 0x4, scoped, tag = 'scoped memory for tpu_custom_call.1']
    #allocation5 [shape = 's32[1]{0}', space=sflag, size = 0x4, scoped, tag = 'scoped memory for tpu_custom_call.1']
    #allocation6 [shape = 'u8[32768]{0}', space=vmem, size = 0x8000, scoped, tag = 'input window, operand 1, single buffered']
    #allocation7 [shape = 's32[1]{0}', space=sflag, size = 0x4, scoped, tag = 'scoped memory for tpu_custom_call.1']
    #allocation8 [shape = 'u8[32768]{0}', space=vmem, size = 0x8000, scoped, tag = 'input window, operand 2, single buffered']
    #allocation9 [shape = 'u8[16384]{0}', space=vmem, size = 0x4000, scoped, tag = 'input window, operand 3, single buffered']
    #allocation10 [shape = 's32[1]{0}', space=sflag, size = 0x4, scoped, tag = 'scoped memory for tpu_custom_call.1']
    #allocation11 [shape = 'u8[4096]{0}', space=vmem, size = 0x1000, scoped, tag = 'output window, operand 0, single buffered']
    %10 = vsyncpa [#allocation4], 0
    %11 = vsyncpa [#allocation7], 0
    %12 = vsyncpa [#allocation10], 0
    %13 = vsyncpa [#allocation5], 0
    // Predicated region
    $region2: #{tpu_custom_call.1} parent=1 // pred_check
      _
    $region3: #{tpu_custom_call.1} parent=1 // pred_check_branch
      %15 = sbr.rel (0) target = $region5
    $region4: #{tpu_custom_call.1} parent=1 // pred_region
      %s17 = ssub.s32 128, 128
      %18 = vsyncadd [#allocation4], %s17
      %s20 = sshll.u32 [#allocation3], 4
      %s21 = int_to_ptr.vmem [resolvable:$true] %s20
      %23 = dma.hbm_to_vmem [thread:$0]  %s0, 128, %s21, [#allocation4]
    $region5: #{tpu_custom_call.1} parent=1 // pred_fallthru
      _
    // Predicated region
    $region6: #{tpu_custom_call.1} parent=1 // pred_check
      _
    $region7: #{tpu_custom_call.1} parent=1 // pred_check_branch
      %25 = sbr.rel (0) target = $region9
    $region8: #{tpu_custom_call.1} parent=1 // pred_region
      %s27 = ssub.s32 1024, 1024
      %28 = vsyncadd [#allocation7], %s27
      %s29 = sshll.u32 [#allocation6], 4
      %s30 = int_to_ptr.vmem [resolvable:$true] %s29
      %35 = dma.hbm_to_vmem [thread:$0]  %s1, 1024, %s30, [#allocation7], 128, 128, 8
    $region9: #{tpu_custom_call.1} parent=1 // pred_fallthru
      _
    // Predicated region
    $region10: #{tpu_custom_call.1} parent=1 // pred_check
      _
    $region11: #{tpu_custom_call.1} parent=1 // pred_check_branch
      %37 = sbr.rel (0) target = $region13
    $region12: #{tpu_custom_call.1} parent=1 // pred_region
      %s39 = ssub.s32 1024, 1024
      %40 = vsyncadd [#allocation7], %s39
      %s41 = sshll.u32 [#allocation8], 4
      %s42 = int_to_ptr.vmem [resolvable:$true] %s41
      %47 = dma.hbm_to_vmem [thread:$0]  %s2, 1024, %s42, [#allocation7], 128, 128, 8
    $region13: #{tpu_custom_call.1} parent=1 // pred_fallthru
      _
    // Predicated region
    $region14: #{tpu_custom_call.1} parent=1 // pred_check
      _
    $region15: #{tpu_custom_call.1} parent=1 // pred_check_branch
      %49 = sbr.rel (0) target = $region17
    $region16: #{tpu_custom_call.1} parent=1 // pred_region
      %s51 = ssub.s32 512, 512
      %52 = vsyncadd [#allocation10], %s51
      %s53 = sshll.u32 [#allocation9], 4
      %s54 = int_to_ptr.vmem [resolvable:$true] %s53
      %59 = dma.hbm_to_vmem [thread:$0]  %s3, 512, %s54, [#allocation10], 128, 128, 8
    $region17: #{tpu_custom_call.1} parent=1 // pred_fallthru
      _
    // Predicated region
    $region18: #{tpu_custom_call.1} parent=1 // pred_check
      _
    $region19: #{tpu_custom_call.1} parent=1 // pred_check_branch
      %61 = sbr.rel (0) target = $region21
    $region20: #{tpu_custom_call.1} parent=1 // pred_region
      _
    $region21: #{tpu_custom_call.1} parent=1 // pred_fallthru
      _
    // Predicated region
    $region22: #{tpu_custom_call.1} parent=1 // pred_check
      _
    $region23: #{tpu_custom_call.1} parent=1 // pred_check_branch
      %63 = sbr.rel (0) target = $region25
    $region24: #{tpu_custom_call.1} parent=1 // pred_region
      %64 = dma.done [#allocation4], 128
    $region25: #{tpu_custom_call.1} parent=1 // pred_fallthru
      _
    // Predicated region
    $region26: #{tpu_custom_call.1} parent=1 // pred_check
      _
    $region27: #{tpu_custom_call.1} parent=1 // pred_check_branch
      %66 = sbr.rel (0) target = $region29
    $region28: #{tpu_custom_call.1} parent=1 // pred_region
      %67 = dma.done [#allocation7], 1024
    $region29: #{tpu_custom_call.1} parent=1 // pred_fallthru
      _
    // Predicated region
    $region30: #{tpu_custom_call.1} parent=1 // pred_check
      _
    $region31: #{tpu_custom_call.1} parent=1 // pred_check_branch
      %69 = sbr.rel (0) target = $region33
    $region32: #{tpu_custom_call.1} parent=1 // pred_region
      %70 = dma.done [#allocation7], 1024
    $region33: #{tpu_custom_call.1} parent=1 // pred_fallthru
      _
    // Predicated region
    $region34: #{tpu_custom_call.1} parent=1 // pred_check
      _
    $region35: #{tpu_custom_call.1} parent=1 // pred_check_branch
      %72 = sbr.rel (0) target = $region37
    $region36: #{tpu_custom_call.1} parent=1 // pred_region
      %73 = dma.done [#allocation10], 512
    $region37: #{tpu_custom_call.1} parent=1 // pred_fallthru
      _
    %v74 = vld [vmem:[#allocation3] sm:$0xff]
    %v75 = vld [vmem:[#allocation9] sm:$0xff]
    %v76 = vld [vmem:[#allocation9 + $0x8] sm:$0xff]
    %v77 = vld [vmem:[#allocation9 + $0x10] sm:$0xff]
    %v78 = vld [vmem:[#allocation9 + $0x18] sm:$0xff]
    %vm79 = vcmask 261120
    %v81 = vsel %vm79, %v74, 0
    %83 = vmatprep.subr.mxu0 0.0
    %84 = vmatpush1.msra.mxu0 0.0
    %85 = vmatprep.subr.mxu0 0.0
    %86 = vmatpush1.msra.mxu0 0.0
    %87 = vmatprep.subr.mxu0 0.0
    %88 = vmatpush1.msra.mxu0 0.0
    %89 = vmatprep.subr.mxu0 0.0
    %90 = vmatpush1.msra.mxu0 0.0
    %91 = vmatprep.subr.mxu0 0.0
    %92 = vmatpush1.msra.mxu0 0.0
    %93 = vmatprep.subr.mxu0 0.0
    %94 = vmatpush1.msra.mxu0 0.0
    %95 = vmatprep.subr.mxu0 0.0
    %96 = vmatpush1.msra.mxu0 0.0
    %97 = vmatprep.subr.mxu0 0.0
    %98 = vmatpush1.msra.mxu0 0.0
    %99 = vmatprep.subr.mxu0 0.0
    %100 = vmatpush1.msra.mxu0 0.0
    %101 = vmatprep.subr.mxu0 0.0
    %102 = vmatpush1.msra.mxu0 0.0
    %103 = vmatprep.subr.mxu0 0.0
    %104 = vmatpush1.msra.mxu0 0.0
    %105 = vmatprep.subr.mxu0 0.0
    %106 = vmatpush1.msra.mxu0 0.0
    %107 = vmatprep.subr.mxu0 0.0
    %108 = vmatpush1.msra.mxu0 %v78
    %109 = vmatprep.subr.mxu0 0.0
    %110 = vmatpush1.msra.mxu0 %v77
    %111 = vmatprep.subr.mxu0 0.0
    %112 = vmatpush1.msra.mxu0 %v76
    %113 = vmatprep.subr.mxu0 0.0
    %114 = vmatpush1.msra.mxu0 %v75
    %115 = vmatprep.subr.mxu0 0.0
    %116 = vmatpush2.msra.mxu0 0.0
    %117 = vmatprep.subr.mxu0 0.0
    %118 = vmatpush2.msra.mxu0 0.0
    %119 = vmatprep.subr.mxu0 0.0
    %120 = vmatpush2.msra.mxu0 0.0
    %121 = vmatprep.subr.mxu0 0.0
    %122 = vmatpush2.msra.mxu0 0.0
    %123 = vmatprep.subr.mxu0 0.0
    %124 = vmatpush2.msra.mxu0 0.0
    %125 = vmatprep.subr.mxu0 0.0
    %126 = vmatpush2.msra.mxu0 0.0
    %127 = vmatprep.subr.mxu0 0.0
    %128 = vmatpush2.msra.mxu0 0.0
    %129 = vmatprep.subr.mxu0 0.0
    %130 = vmatpush2.msra.mxu0 0.0
    %131 = vmatprep.subr.mxu0 0.0
    %132 = vmatpush2.msra.mxu0 0.0
    %133 = vmatprep.subr.mxu0 0.0
    %134 = vmatpush2.msra.mxu0 0.0
    %135 = vmatprep.subr.mxu0 0.0
    %136 = vmatpush2.msra.mxu0 0.0
    %137 = vmatprep.subr.mxu0 0.0
    %138 = vmatpush2.msra.mxu0 0.0
    %139 = vmatprep.subr.mxu0 0.0
    %140 = vmatpush2.msra.mxu0 0.0
    %141 = vmatprep.subr.mxu0 0.0
    %142 = vmatpush2.msra.mxu0 0.0
    %143 = vmatprep.subr.mxu0 0.0
    %144 = vmatpush2.msra.mxu0 0.0
    %145 = vmatprep.subr.mxu0 0.0
    %146 = vmatpush2.msra.mxu0 0.0
    %147 = vmatprep.mubr.f32.mxu0 0.0
    %148 = vmatmul.mubr.f32.gmra.mxu0 %v81
    %v149 = vpop.f32.mrf.mxu0
    %v150 = vadd.f32 0.0, %v149
    %v151 = vpop.f32.mrf.mxu0
    %152 = vdwg.mxu0
    %v153 = vld [vmem:[#allocation6] sm:$0xff]
    %v154 = vld [vmem:[#allocation6 + $0x8] sm:$0xff]
    %v155 = vld [vmem:[#allocation6 + $0x10] sm:$0xff]
    %v156 = vld [vmem:[#allocation6 + $0x18] sm:$0xff]
    %v157 = vld [vmem:[#allocation6 + $0x20] sm:$0xff]
    %v158 = vld [vmem:[#allocation6 + $0x28] sm:$0xff]
    %v159 = vld [vmem:[#allocation6 + $0x30] sm:$0xff]
    %v160 = vld [vmem:[#allocation6 + $0x38] sm:$0xff]
    %v161 = vld [vmem:[#allocation8] sm:$0xff]
    %v162 = vld [vmem:[#allocation8 + $0x8] sm:$0xff]
    %v163 = vld [vmem:[#allocation8 + $0x10] sm:$0xff]
    %v164 = vld [vmem:[#allocation8 + $0x18] sm:$0xff]
    %v165 = vld [vmem:[#allocation8 + $0x20] sm:$0xff]
    %v166 = vld [vmem:[#allocation8 + $0x28] sm:$0xff]
    %v167 = vld [vmem:[#allocation8 + $0x30] sm:$0xff]
    %v168 = vld [vmem:[#allocation8 + $0x38] sm:$0xff]
    %vm169 = vcmask 523264
    %v171 = vsel %vm169, %v153, 0
    %v174 = vsel %vm169, %v154, 0
    %v177 = vsel %vm169, %v155, 0
    %v180 = vsel %vm169, %v156, 0
    %v183 = vsel %vm169, %v157, 0
    %v186 = vsel %vm169, %v158, 0
    %v189 = vsel %vm169, %v159, 0
    %v192 = vsel %vm169, %v160, 0
    %194 = vmatprep.subr.mxu0 0.0
    %195 = vmatpush1.msra.mxu0 0.0
    %196 = vmatprep.subr.mxu0 0.0
    %197 = vmatpush1.msra.mxu0 0.0
    %198 = vmatprep.subr.mxu0 0.0
    %199 = vmatpush1.msra.mxu0 0.0
    %200 = vmatprep.subr.mxu0 0.0
    %201 = vmatpush1.msra.mxu0 0.0
    %202 = vmatprep.subr.mxu0 0.0
    %203 = vmatpush1.msra.mxu0 0.0
    %204 = vmatprep.subr.mxu0 0.0
    %205 = vmatpush1.msra.mxu0 0.0
    %206 = vmatprep.subr.mxu0 0.0
    %207 = vmatpush1.msra.mxu0 0.0
    %208 = vmatprep.subr.mxu0 0.0
    %209 = vmatpush1.msra.mxu0 0.0
    %210 = vmatprep.subr.mxu0 0.0
    %211 = vmatpush1.msra.mxu0 %v168
    %212 = vmatprep.subr.mxu0 0.0
    %213 = vmatpush1.msra.mxu0 %v167
    %214 = vmatprep.subr.mxu0 0.0
    %215 = vmatpush1.msra.mxu0 %v166
    %216 = vmatprep.subr.mxu0 0.0
    %217 = vmatpush1.msra.mxu0 %v165
    %218 = vmatprep.subr.mxu0 0.0
    %219 = vmatpush1.msra.mxu0 %v164
    %220 = vmatprep.subr.mxu0 0.0
    %221 = vmatpush1.msra.mxu0 %v163
    %222 = vmatprep.subr.mxu0 0.0
    %223 = vmatpush1.msra.mxu0 %v162
    %224 = vmatprep.subr.mxu0 0.0
    %225 = vmatpush1.msra.mxu0 %v161
    %226 = vmatprep.subr.mxu0 0.0
    %227 = vmatpush2.msra.mxu0 0.0
    %228 = vmatprep.subr.mxu0 0.0
    %229 = vmatpush2.msra.mxu0 0.0
    %230 = vmatprep.subr.mxu0 0.0
    %231 = vmatpush2.msra.mxu0 0.0
    %232 = vmatprep.subr.mxu0 0.0
    %233 = vmatpush2.msra.mxu0 0.0
    %234 = vmatprep.subr.mxu0 0.0
    %235 = vmatpush2.msra.mxu0 0.0
    %236 = vmatprep.subr.mxu0 0.0
    %237 = vmatpush2.msra.mxu0 0.0
    %238 = vmatprep.subr.mxu0 0.0
    %239 = vmatpush2.msra.mxu0 0.0
    %240 = vmatprep.subr.mxu0 0.0
    %241 = vmatpush2.msra.mxu0 0.0
    %242 = vmatprep.subr.mxu0 0.0
    %243 = vmatpush2.msra.mxu0 0.0
    %244 = vmatprep.subr.mxu0 0.0
    %245 = vmatpush2.msra.mxu0 0.0
    %246 = vmatprep.subr.mxu0 0.0
    %247 = vmatpush2.msra.mxu0 0.0
    %248 = vmatprep.subr.mxu0 0.0
    %249 = vmatpush2.msra.mxu0 0.0
    %250 = vmatprep.subr.mxu0 0.0
    %251 = vmatpush2.msra.mxu0 0.0
    %252 = vmatprep.subr.mxu0 0.0
    %253 = vmatpush2.msra.mxu0 0.0
    %254 = vmatprep.subr.mxu0 0.0
    %255 = vmatpush2.msra.mxu0 0.0
    %256 = vmatprep.subr.mxu0 0.0
    %257 = vmatpush2.msra.mxu0 0.0
    %258 = vmatprep.mubr.f32.mxu0 0.0
    %259 = vmatmul.mubr.f32.gmra.mxu0 %v171
    %v260 = vpop.f32.mrf.mxu0
    %v261 = vadd.f32 0.0, %v260
    %v262 = vpop.f32.mrf.mxu0
    %263 = vmatprep.mubr.f32.mxu0 0.0
    %264 = vmatmul.mubr.f32.gmra.mxu0 %v174
    %v265 = vpop.f32.mrf.mxu0
    %v266 = vadd.f32 0.0, %v265
    %v267 = vpop.f32.mrf.mxu0
    %268 = vmatprep.mubr.f32.mxu0 0.0
    %269 = vmatmul.mubr.f32.gmra.mxu0 %v177
    %v270 = vpop.f32.mrf.mxu0
    %v271 = vadd.f32 0.0, %v270
    %v272 = vpop.f32.mrf.mxu0
    %273 = vmatprep.mubr.f32.mxu0 0.0
    %274 = vmatmul.mubr.f32.gmra.mxu0 %v180
    %v275 = vpop.f32.mrf.mxu0
    %v276 = vadd.f32 0.0, %v275
    %v277 = vpop.f32.mrf.mxu0
    %278 = vmatprep.mubr.f32.mxu0 0.0
    %279 = vmatmul.mubr.f32.gmra.mxu0 %v183
    %v280 = vpop.f32.mrf.mxu0
    %v281 = vadd.f32 0.0, %v280
    %v282 = vpop.f32.mrf.mxu0
    %283 = vmatprep.mubr.f32.mxu0 0.0
    %284 = vmatmul.mubr.f32.gmra.mxu0 %v186
    %v285 = vpop.f32.mrf.mxu0
    %v286 = vadd.f32 0.0, %v285
    %v287 = vpop.f32.mrf.mxu0
    %288 = vmatprep.mubr.f32.mxu0 0.0
    %289 = vmatmul.mubr.f32.gmra.mxu0 %v189
    %v290 = vpop.f32.mrf.mxu0
    %v291 = vadd.f32 0.0, %v290
    %v292 = vpop.f32.mrf.mxu0
    %293 = vmatprep.mubr.f32.mxu0 0.0
    %294 = vmatmul.mubr.f32.gmra.mxu0 %v192
    %v295 = vpop.f32.mrf.mxu0
    %v296 = vadd.f32 0.0, %v295
    %v297 = vpop.f32.mrf.mxu0
    %298 = vdwg.mxu0
    %v299 = vadd.f32 %v261, %v150
    %v300 = vadd.f32 %v266, %v150
    %v301 = vadd.f32 %v271, %v150
    %v302 = vadd.f32 %v276, %v150
    %v303 = vadd.f32 %v281, %v150
    %v304 = vadd.f32 %v286, %v150
    %v305 = vadd.f32 %v291, %v150
    %v306 = vadd.f32 %v296, %v150
    %v307 = vtanh.pop %v299
    %v308 = vtanh.pop %v300
    %v309 = vtanh.pop %v301
    %v310 = vtanh.pop %v302
    %v311 = vtanh.pop %v303
    %v312 = vtanh.pop %v304
    %v313 = vtanh.pop %v305
    %v314 = vtanh.pop %v306
    %v315 = vld [vmem:[%s4] sm:$0x1]
    %v317 = vlaneseq
    %v318 = vshrl.u32 %v317, 7
    %v319 = vsub.s32 0, %v318
    %v320 = vrot.slane %v315, %v319
    %v322 = vmul.f32 %v307, %v320
    %v323 = vmul.f32 %v308, %v320
    %v324 = vmul.f32 %v309, %v320
    %v325 = vmul.f32 %v310, %v320
    %v326 = vmul.f32 %v311, %v320
    %v327 = vmul.f32 %v312, %v320
    %v328 = vmul.f32 %v313, %v320
    %v329 = vmul.f32 %v314, %v320
    %330 = vadd.xlane.f32.xlu0 %v322
    %v331 = vpop.xlane.xlu0 %330
    %332 = vadd.xlane.f32.xlu0 %v323
    %v333 = vpop.xlane.xlu0 %332
    %334 = vadd.xlane.f32.xlu0 %v324
    %v335 = vpop.xlane.xlu0 %334
    %336 = vadd.xlane.f32.xlu0 %v325
    %v337 = vpop.xlane.xlu0 %336
    %338 = vadd.xlane.f32.xlu0 %v326
    %v339 = vpop.xlane.xlu0 %338
    %340 = vadd.xlane.f32.xlu0 %v327
    %v341 = vpop.xlane.xlu0 %340
    %342 = vadd.xlane.f32.xlu0 %v328
    %v343 = vpop.xlane.xlu0 %342
    %344 = vadd.xlane.f32.xlu0 %v329
    %v345 = vpop.xlane.xlu0 %344
    %s346 = smul.u32 0, 8
    %v355 = vlaneseq
    %v356 = vand.u32 %v355, 127
    %v357 = vlaneseq
    %v358 = vshrl.u32 %v357, 7
    %v359 = vsub.s32 %v356, %v358
    %v360 = vrot.slane %v331, %v359
    %v361 = vlaneseq
    %v362 = vshrl.u32 %v361, 7
    %v363 = vsub.s32 %v356, %v362
    %v364 = vrot.slane %v333, %v363
    %v365 = vlaneseq
    %v366 = vshrl.u32 %v365, 7
    %v367 = vsub.s32 %v356, %v366
    %v368 = vrot.slane %v335, %v367
    %v369 = vlaneseq
    %v370 = vshrl.u32 %v369, 7
    %v371 = vsub.s32 %v356, %v370
    %v372 = vrot.slane %v337, %v371
    %v373 = vlaneseq
    %v374 = vshrl.u32 %v373, 7
    %v375 = vsub.s32 %v356, %v374
    %v376 = vrot.slane %v339, %v375
    %v377 = vlaneseq
    %v378 = vshrl.u32 %v377, 7
    %v379 = vsub.s32 %v356, %v378
    %v380 = vrot.slane %v341, %v379
    %v381 = vlaneseq
    %v382 = vshrl.u32 %v381, 7
    %v383 = vsub.s32 %v356, %v382
    %v384 = vrot.slane %v343, %v383
    %v385 = vlaneseq
    %v386 = vshrl.u32 %v385, 7
    %v387 = vsub.s32 %v356, %v386
    %v388 = vrot.slane %v345, %v387
    %vm389 = vcmask 1041409
    %v390 = vsel %vm389, %v364, %v360
    %vm391 = vcmask 1042434
    %v392 = vsel %vm391, %v368, %v390
    %vm393 = vcmask 1043459
    %v394 = vsel %vm393, %v372, %v392
    %vm395 = vcmask 1044484
    %v396 = vsel %vm395, %v376, %v394
    %vm397 = vcmask 1045509
    %v398 = vsel %vm397, %v380, %v396
    %vm399 = vcmask 1046534
    %v400 = vsel %vm399, %v384, %v398
    %vm401 = vcmask 1047559
    %v402 = vsel %vm401, %v388, %v400
    %s404 = scalar_lea.vmem [#allocation2], %s346
    %vm405 = vcmask 64512
    %406 = vst.msk [vmem:[%s404] sm:$0xff] %vm405, %v402
    %p407 = scmp.eq.s32.totalorder 0, 0
    // Predicated region
    $region38: #{tpu_custom_call.1} parent=1 // pred_check
      %p408 = pneg %p407
    $region39: #{tpu_custom_call.1} parent=1 // pred_check_branch
      %410 = sbr.rel (%p408) target = $region41
    $region40: #{tpu_custom_call.1} parent=1 // pred_region
      %v411 = vld [vmem:[#allocation2] sm:$0xff]
      %v412 = vld [vmem:[#allocation2 + $0x8] sm:$0xff]
      %v413 = vld [vmem:[#allocation2 + $0x10] sm:$0xff]
      %v414 = vld [vmem:[#allocation2 + $0x18] sm:$0xff]
      %v415 = vld [vmem:[#allocation2 + $0x20] sm:$0xff]
      %v416 = vld [vmem:[#allocation2 + $0x28] sm:$0xff]
      %v417 = vld [vmem:[#allocation2 + $0x30] sm:$0xff]
      %v418 = vld [vmem:[#allocation2 + $0x38] sm:$0xff]
      %v419 = vld [vmem:[#allocation2 + $0x40] sm:$0xff]
      %v420 = vld [vmem:[#allocation2 + $0x48] sm:$0xff]
      %v421 = vld [vmem:[#allocation2 + $0x50] sm:$0xff]
      %v422 = vld [vmem:[#allocation2 + $0x58] sm:$0xff]
      %v423 = vld [vmem:[#allocation2 + $0x60] sm:$0xff]
      %v424 = vld [vmem:[#allocation2 + $0x68] sm:$0xff]
      %v425 = vld [vmem:[#allocation2 + $0x70] sm:$0xff]
      %v426 = vld [vmem:[#allocation2 + $0x78] sm:$0xff]
      %427 = vxpose.xlu0.b32.start [1/16] %v411, 128
      %428 = vxpose.xlu0.b32.cont [2/16] %v412, 128
      %429 = vxpose.xlu0.b32.cont [3/16] %v413, 128
      %430 = vxpose.xlu0.b32.cont [4/16] %v414, 128
      %431 = vxpose.xlu0.b32.cont [5/16] %v415, 128
      %432 = vxpose.xlu0.b32.cont [6/16] %v416, 128
      %433 = vxpose.xlu0.b32.cont [7/16] %v417, 128
      %434 = vxpose.xlu0.b32.cont [8/16] %v418, 128
      %435 = vxpose.xlu0.b32.cont [9/16] %v419, 128
      %436 = vxpose.xlu0.b32.cont [10/16] %v420, 128
      %437 = vxpose.xlu0.b32.cont [11/16] %v421, 128
      %438 = vxpose.xlu0.b32.cont [12/16] %v422, 128
      %439 = vxpose.xlu0.b32.cont [13/16] %v423, 128
      %440 = vxpose.xlu0.b32.cont [14/16] %v424, 128
      %441 = vxpose.xlu0.b32.cont [15/16] %v425, 128
      %442 = vxpose.xlu0.b32.end [16/16] %v426, 128
      %v443 = vpop.trf.xlu0
      %v444 = vpop.trf.xlu0
      %v445 = vpop.trf.xlu0
      %v446 = vpop.trf.xlu0
      %v447 = vpop.trf.xlu0
      %v448 = vpop.trf.xlu0
      %v449 = vpop.trf.xlu0
      %v450 = vpop.trf.xlu0
      %v451 = vpop.trf.xlu0
      %v452 = vpop.trf.xlu0
      %v453 = vpop.trf.xlu0
      %v454 = vpop.trf.xlu0
      %v455 = vpop.trf.xlu0
      %v456 = vpop.trf.xlu0
      %v457 = vpop.trf.xlu0
      %v458 = vpop.trf.xlu0
      %vm459 = vcmp.lt.s32.totalorder %v356, 8
      %v460 = vsel %vm459, %v443, -inf
      %461 = vmax.xlane.f32.xlu0 %v460
      %v462 = vpop.xlane.xlu0 %461
      %v463 = vsub.f32 %v460, %v462
      %v464 = vmul.f32 %v463, 1.442695
      %v465 = vpow.pop %v464
      %466 = vadd.xlane.f32.xlu0 %v465
      %v467 = vpop.xlane.xlu0 %466
      %v468 = vrcp.pop %v467
      %v469 = vmul.f32 %v467, %v468
      %v470 = vsub.f32 2.0, %v469
      %v471 = vmul.f32 %v468, %v470
      %v472 = vmul.f32 %v465, %v471
      %473 = vst [vmem:[#allocation11] sm:$0xff] %v472
    $region41: #{tpu_custom_call.1} parent=1 // pred_fallthru
      _
    // Predicated region
    $region42: #{tpu_custom_call.1} parent=1 // pred_check
      _
    $region43: #{tpu_custom_call.1} parent=1 // pred_check_branch
      %475 = sbr.rel (0) target = $region45
    $region44: #{tpu_custom_call.1} parent=1 // pred_region
      %s477 = ssub.s32 128, 128
      %478 = vsyncadd [#allocation5], %s477
      %s480 = sshll.u32 [#allocation11], 4
      %s481 = int_to_ptr.vmem [resolvable:$true] %s480
      %483 = dma.vmem_to_hbm [thread:$0]  %s481, 128, %s5, [#allocation5]
    $region45: #{tpu_custom_call.1} parent=1 // pred_fallthru
      _
    // Predicated region
    $region46: #{tpu_custom_call.1} parent=1 // pred_check
      _
    $region47: #{tpu_custom_call.1} parent=1 // pred_check_branch
      %485 = sbr.rel (0) target = $region49
    $region48: #{tpu_custom_call.1} parent=1 // pred_region
      %486 = dma.done [#allocation5], 128
    $region49: #{tpu_custom_call.1} parent=1 // pred_fallthru
      _
    %487 = vsyncpa [#allocation4], 1
    %488 = vsyncpa [#allocation7], 1
    %489 = vsyncpa [#allocation10], 1
    %490 = vsyncpa [#allocation5], 1

</llo_original>
